<compile_context>
chip_gen: v6e
topology: v6e:2x2x1
jax: 0.10.0
libtpu: 0.0.40
codegen_flags: <defaults>
</compile_context>

<pallas_src>
import math

import jax
import jax.numpy as jnp
from jax import lax
from jax.experimental import pallas as pl
from jax.experimental.pallas import tpu as pltpu


def _pui_loss_kernel(lamda_ref, n_ref, xt_ref, yt_ref, out_ref,
                     gram_ref, sx2_ref, sy2_ref, sx_ref):
    """Streams (K, tn) tiles of x^T / y^T and accumulates K-sized statistics."""
    i = pl.program_id(0)
    n_steps = pl.num_programs(0)
    tn = xt_ref.shape[1]

    @pl.when(i == 0)
    def _init():
        gram_ref[...] = jnp.zeros_like(gram_ref)
        sx2_ref[...] = jnp.zeros_like(sx2_ref)
        sy2_ref[...] = jnp.zeros_like(sy2_ref)
        sx_ref[...] = jnp.zeros_like(sx_ref)

    # Native-dtype stream, upcast in-register; accumulation is f32.
    xt = xt_ref[...].astype(jnp.float32)          # (K, tn) lane-dense stream
    yt = yt_ref[...].astype(jnp.float32)          # (K, tn)

    def _accumulate(xv, yv):
        # Gram matrix X^T Y: contract the (lane) N axis of both operands —
        # MXU-native A @ B^T form, no transpose of the streamed tiles.
        gram_ref[...] += lax.dot_general(
            xv, yv,
            dimension_numbers=(((1,), (1,)), ((), ())),
            preferred_element_type=jnp.float32,
        )
        # Per-column statistics (dense lane reductions, f32 accumulators).
        sx2_ref[...] += jnp.sum(xv * xv, axis=1, keepdims=True)   # (K, 1)
        sy2_ref[...] += jnp.sum(yv * yv, axis=1, keepdims=True)   # (K, 1)
        sx_ref[...] += jnp.sum(xv, axis=1, keepdims=True)         # (K, 1)

    # Number of lanes of this tile that lie inside the true N (no host pad).
    valid = n_ref[0] - i * tn

    @pl.when(valid >= tn)
    def _full_tile():
        _accumulate(xt, yt)

    @pl.when(valid < tn)
    def _ragged_tail():
        lane = lax.broadcasted_iota(jnp.int32, xt.shape, 1)
        keep = lane < valid
        zero = jnp.float32(0.0)
        _accumulate(jnp.where(keep, xt, zero), jnp.where(keep, yt, zero))

    @pl.when(i == n_steps - 1)
    def _finalize():
        K = gram_ref.shape[0]
        eps = 1e-12                                            # F.normalize eps

        inv_nx = 1.0 / jnp.maximum(jnp.sqrt(sx2_ref[...]), eps)   # (K, 1)
        inv_ny = 1.0 / jnp.maximum(jnp.sqrt(sy2_ref[...]), eps)   # (K, 1)

        eye = (lax.broadcasted_iota(jnp.int32, (K, K), 0) ==
               lax.broadcasted_iota(jnp.int32, (K, K), 1)).astype(jnp.float32)

        # pui = D_x^{-1} (X^T Y) D_y^{-1}.  Column scaling done via a tiny
        # (K,K) @ diag(inv_ny) matmul to avoid relayout of a (K,1) vector.
        diag_inv_ny = eye * inv_ny
        pui = lax.dot_general(
            gram_ref[...] * inv_nx, diag_inv_ny,
            dimension_numbers=(((1,), (0,)), ((), ())),
            preferred_element_type=jnp.float32,
        )                                                       # (K, K)

        # Cross entropy with targets arange(K), mean reduction.
        m = jnp.max(pui, axis=1, keepdims=True)                 # (K, 1)
        lse = m + jnp.log(jnp.sum(jnp.exp(pui - m), axis=1, keepdims=True))
        diag = jnp.sum(pui * eye, axis=1, keepdims=True)        # pui[i, i]
        loss_ce = jnp.sum(lse - diag) * (1.0 / K)

        # Negative-entropy regularizer on the column masses of x.
        # NOTE: the eps clamp inside the log is identical for strictly
        # positive probabilities; PyTorch would produce NaN for an exactly
        # zero column (intentional robustness deviation).
        p = sx_ref[...]                                         # (K, 1)
        p = p / jnp.sum(p)
        loss_ne = jnp.float32(math.log(K)) + jnp.sum(
            p * jnp.log(jnp.maximum(p, eps)))

        out_ref[0] = loss_ce + lamda_ref[0] * loss_ne


def pui_loss(x, y, lamda=2.0, *, block_n=32768):
    """Partition Uncertainty Index loss (matches the PyTorch PUILoss.forward).

    x, y: (N, K) assignment probabilities (any float dtype; f32 accumulation).
    block_n: streamed N-tile size (multiple of 128).  32768 keeps per-step
    DMA time well above the fixed grid-step overhead and fits the default
    VMEM budget on v5e/v6e/v7x; raise to 65536-131072 on v5e/v6e if desired.
    """
    assert x.shape == y.shape, 'Inputs are required to have same shape'
    assert block_n % 128 == 0
    N, K = x.shape

    # Lane-dense (K, N) streaming layout.  No pad, no dtype cast on the host;
    # the kernel masks the ragged tail and upcasts itself.
    # TODO(synk): produce x/y in (K, N) layout upstream to drop this transpose.
    xt = jnp.transpose(x)     # (K, N)
    yt = jnp.transpose(y)

    if N <= block_n:
        tn = N                # single block == full array dim (always legal)
    else:
        tn = block_n          # multiple of 128; last block masked in-kernel
    grid_n = pl.cdiv(N, tn)

    # VMEM budget: 2 inputs x 2 pipeline buffers x tile + elementwise temps,
    # capped at 48 MiB so it also fits v7x's 64 MiB physical VMEM.
    tile_bytes = K * tn * jnp.dtype(x.dtype).itemsize
    vmem_limit = int(min(48 * 1024 * 1024,
                         max(32 * 1024 * 1024, 8 * tile_bytes)))

    lam = jnp.asarray([lamda], dtype=jnp.float32)
    n_true = jnp.asarray([N], dtype=jnp.int32)

    out = pl.pallas_call(
        _pui_loss_kernel,
        out_shape=jax.ShapeDtypeStruct((1,), jnp.float32),
        grid=(grid_n,),
        in_specs=[
            pl.BlockSpec(memory_space=pltpu.MemorySpace.SMEM),   # lamda
            pl.BlockSpec(memory_space=pltpu.MemorySpace.SMEM),   # true N
            pl.BlockSpec((K, tn), lambda i: (0, i)),             # x^T tile
            pl.BlockSpec((K, tn), lambda i: (0, i)),             # y^T tile
        ],
        out_specs=pl.BlockSpec(memory_space=pltpu.MemorySpace.SMEM),
        scratch_shapes=[
            pltpu.VMEM((K, K), jnp.float32),    # gram accumulator
            pltpu.VMEM((K, 1), jnp.float32),    # sum(x^2) per column
            pltpu.VMEM((K, 1), jnp.float32),    # sum(y^2) per column
            pltpu.VMEM((K, 1), jnp.float32),    # sum(x)   per column
        ],
        compiler_params=pltpu.CompilerParams(
            dimension_semantics=("arbitrary",),
            vmem_limit_bytes=vmem_limit,
        ),
    )(lam, n_true, xt, yt)
    return out[0]


def _pui_loss_ref(x, y, lamda=2.0):
    """Plain-JAX reference mirroring the PyTorch forward."""
    eps = 1e-12
    xf = x.astype(jnp.float32)
    yf = y.astype(jnp.float32)
    xn = xf / jnp.maximum(jnp.linalg.norm(xf, axis=0, keepdims=True), eps)
    yn = yf / jnp.maximum(jnp.linalg.norm(yf, axis=0, keepdims=True), eps)
    pui = xn.T @ yn
    K = pui.shape[0]
    lse = jax.scipy.special.logsumexp(pui, axis=1)
    loss_ce = jnp.mean(lse - jnp.diag(pui))
    p = xf.sum(0)
    p = p / p.sum()
    loss_ne = math.log(K) + jnp.sum(p * jnp.log(p))
    return loss_ce + lamda * loss_ne


if __name__ == "__main__":
    key = jax.random.PRNGKey(0)
    kx, ky = jax.random.split(key)
    # N deliberately NOT a multiple of the tile to exercise the in-kernel
    # ragged-tail masking (no host pad).
    N, K = 500, 16
    x = jax.nn.softmax(jax.random.normal(kx, (N, K), dtype=jnp.float32), axis=-1)
    y = jax.nn.softmax(jax.random.normal(ky, (N, K), dtype=jnp.float32), axis=-1)

    ref = _pui_loss_ref(x, y, lamda=2.0)

    # Small tile -> 4 grid steps (init / accumulate / masked tail / finalize).
    loss_multi = jax.block_until_ready(pui_loss(x, y, lamda=2.0, block_n=128))
    assert jnp.allclose(loss_multi, ref, atol=1e-5, rtol=1e-5), (loss_multi, ref)

    # Default large tile -> single full block (tn == N) path.
    loss_single = jax.block_until_ready(pui_loss(x, y, lamda=2.0))
    assert jnp.allclose(loss_single, ref, atol=1e-5, rtol=1e-5), (loss_single, ref)

    print("KERNEL_OK")
</pallas_src>

<mosaic_0001>
module attributes {stable_mosaic.version = 11 : i64} {
  func.func @_pui_loss_kernel(%arg0: i32, %arg1: memref<1xf32, #tpu.memory_space<smem>>, %arg2: memref<1xi32, #tpu.memory_space<smem>>, %arg3: memref<16x128xf32, #tpu.memory_space<vmem>>, %arg4: memref<16x128xf32, #tpu.memory_space<vmem>>, %arg5: memref<1xf32, #tpu.memory_space<smem>>, %arg6: memref<16x16xf32, #tpu.memory_space<vmem>>, %arg7: memref<16x1xf32, #tpu.memory_space<vmem>>, %arg8: memref<16x1xf32, #tpu.memory_space<vmem>>, %arg9: memref<16x1xf32, #tpu.memory_space<vmem>>) attributes {dimension_semantics = [#tpu.dimension_semantics<arbitrary>], iteration_bounds = array<i64: 4>, scalar_prefetch = 0 : i64, scratch_operands = 4 : i64, tpu.core_type = #tpu.core_type<tc>, window_params = [{transform_indices = @transform_0, window_bounds = array<i64: 1>}, {transform_indices = @transform_1, window_bounds = array<i64: 1>}, {transform_indices = @transform_2, window_bounds = array<i64: 16, 128>}, {transform_indices = @transform_3, window_bounds = array<i64: 16, 128>}, {transform_indices = @transform_4, window_bounds = array<i64: 1>}]} {
    %c0_i32 = arith.constant 0 : i32
    %0 = arith.cmpi eq, %arg0, %c0_i32 : i32
    %1 = arith.extui %0 : i1 to i32
    %c0_i32_0 = arith.constant 0 : i32
    %2 = arith.cmpi ne, %1, %c0_i32_0 : i32
    scf.if %2 {
      %cst = arith.constant 0.000000e+00 : f32
      %17 = vector.broadcast %cst : f32 to vector<16x16xf32>
      %c0_10 = arith.constant 0 : index
      %c0_11 = arith.constant 0 : index
      %18 = vector.load %arg6[%c0_10, %c0_11] : memref<16x16xf32, #tpu.memory_space<vmem>>, vector<16x16xf32>
      tpu.vector_store %arg6[%c0_10, %c0_11], %17 {strides = array<i32>} : memref<16x16xf32, #tpu.memory_space<vmem>>, vector<16x16xf32>,
      %cst_12 = arith.constant 0.000000e+00 : f32
      %19 = vector.broadcast %cst_12 : f32 to vector<16x1xf32>
      %c0_13 = arith.constant 0 : index
      %c0_14 = arith.constant 0 : index
      %20 = vector.load %arg7[%c0_13, %c0_14] : memref<16x1xf32, #tpu.memory_space<vmem>>, vector<16x1xf32>
      tpu.vector_store %arg7[%c0_13, %c0_14], %19 {strides = array<i32>} : memref<16x1xf32, #tpu.memory_space<vmem>>, vector<16x1xf32>,
      %cst_15 = arith.constant 0.000000e+00 : f32
      %21 = vector.broadcast %cst_15 : f32 to vector<16x1xf32>
      %c0_16 = arith.constant 0 : index
      %c0_17 = arith.constant 0 : index
      %22 = vector.load %arg8[%c0_16, %c0_17] : memref<16x1xf32, #tpu.memory_space<vmem>>, vector<16x1xf32>
      tpu.vector_store %arg8[%c0_16, %c0_17], %21 {strides = array<i32>} : memref<16x1xf32, #tpu.memory_space<vmem>>, vector<16x1xf32>,
      %cst_18 = arith.constant 0.000000e+00 : f32
      %23 = vector.broadcast %cst_18 : f32 to vector<16x1xf32>
      %c0_19 = arith.constant 0 : index
      %c0_20 = arith.constant 0 : index
      %24 = vector.load %arg9[%c0_19, %c0_20] : memref<16x1xf32, #tpu.memory_space<vmem>>, vector<16x1xf32>
      tpu.vector_store %arg9[%c0_19, %c0_20], %23 {strides = array<i32>} : memref<16x1xf32, #tpu.memory_space<vmem>>, vector<16x1xf32>,
    } else {
    }
    %c0 = arith.constant 0 : index
    %c0_1 = arith.constant 0 : index
    %3 = vector.load %arg3[%c0, %c0_1] : memref<16x128xf32, #tpu.memory_space<vmem>>, vector<16x128xf32>
    %c0_2 = arith.constant 0 : index
    %c0_3 = arith.constant 0 : index
    %4 = vector.load %arg4[%c0_2, %c0_3] : memref<16x128xf32, #tpu.memory_space<vmem>>, vector<16x128xf32>
    %c0_4 = arith.constant 0 : index
    %5 = memref.load %arg2[%c0_4] : memref<1xi32, #tpu.memory_space<smem>>
    %c128_i32 = arith.constant 128 : i32
    %6 = arith.muli %arg0, %c128_i32 : i32
    %7 = arith.subi %5, %6 : i32
    %c128_i32_5 = arith.constant 128 : i32
    %8 = arith.cmpi sge, %7, %c128_i32_5 : i32
    %9 = arith.extui %8 : i1 to i32
    %c0_i32_6 = arith.constant 0 : i32
    %10 = arith.cmpi ne, %9, %c0_i32_6 : i32
    scf.if %10 {
      %c0_10 = arith.constant 0 : index
      %c0_11 = arith.constant 0 : index
      %17 = vector.load %arg6[%c0_10, %c0_11] : memref<16x16xf32, #tpu.memory_space<vmem>>, vector<16x16xf32>
      %cst = arith.constant dense<0.000000e+00> : vector<16x16xf32>
      %18 = tpu.matmul %3, %4, %cst {dimension_numbers = #tpu.dot_dimension_numbers<[1], [1], [0], [0], [0, 0, 1, 0], [], []>} : vector<16x128xf32>, vector<16x128xf32>, vector<16x16xf32> -> vector<16x16xf32>
      %19 = arith.addf %17, %18 : vector<16x16xf32>
      %c0_12 = arith.constant 0 : index
      %c0_13 = arith.constant 0 : index
      %20 = vector.load %arg6[%c0_12, %c0_13] : memref<16x16xf32, #tpu.memory_space<vmem>>, vector<16x16xf32>
      tpu.vector_store %arg6[%c0_12, %c0_13], %19 {strides = array<i32>} : memref<16x16xf32, #tpu.memory_space<vmem>>, vector<16x16xf32>,
      %c0_14 = arith.constant 0 : index
      %c0_15 = arith.constant 0 : index
      %21 = vector.load %arg7[%c0_14, %c0_15] : memref<16x1xf32, #tpu.memory_space<vmem>>, vector<16x1xf32>
      %22 = arith.mulf %3, %3 : vector<16x128xf32>
      %cst_16 = arith.constant dense<0.000000e+00> : vector<16xf32>
      %23 = vector.multi_reduction <add>, %22, %cst_16 [1] : vector<16x128xf32> to vector<16xf32>
      %24 = vector.shape_cast %23 : vector<16xf32> to vector<16x1xf32>
      %25 = arith.addf %21, %24 : vector<16x1xf32>
      %c0_17 = arith.constant 0 : index
      %c0_18 = arith.constant 0 : index
      %26 = vector.load %arg7[%c0_17, %c0_18] : memref<16x1xf32, #tpu.memory_space<vmem>>, vector<16x1xf32>
      tpu.vector_store %arg7[%c0_17, %c0_18], %25 {strides = array<i32>} : memref<16x1xf32, #tpu.memory_space<vmem>>, vector<16x1xf32>,
      %c0_19 = arith.constant 0 : index
      %c0_20 = arith.constant 0 : index
      %27 = vector.load %arg8[%c0_19, %c0_20] : memref<16x1xf32, #tpu.memory_space<vmem>>, vector<16x1xf32>
      %28 = arith.mulf %4, %4 : vector<16x128xf32>
      %cst_21 = arith.constant dense<0.000000e+00> : vector<16xf32>
      %29 = vector.multi_reduction <add>, %28, %cst_21 [1] : vector<16x128xf32> to vector<16xf32>
      %30 = vector.shape_cast %29 : vector<16xf32> to vector<16x1xf32>
      %31 = arith.addf %27, %30 : vector<16x1xf32>
      %c0_22 = arith.constant 0 : index
      %c0_23 = arith.constant 0 : index
      %32 = vector.load %arg8[%c0_22, %c0_23] : memref<16x1xf32, #tpu.memory_space<vmem>>, vector<16x1xf32>
      tpu.vector_store %arg8[%c0_22, %c0_23], %31 {strides = array<i32>} : memref<16x1xf32, #tpu.memory_space<vmem>>, vector<16x1xf32>,
      %c0_24 = arith.constant 0 : index
      %c0_25 = arith.constant 0 : index
      %33 = vector.load %arg9[%c0_24, %c0_25] : memref<16x1xf32, #tpu.memory_space<vmem>>, vector<16x1xf32>
      %cst_26 = arith.constant dense<0.000000e+00> : vector<16xf32>
      %34 = vector.multi_reduction <add>, %3, %cst_26 [1] : vector<16x128xf32> to vector<16xf32>
      %35 = vector.shape_cast %34 : vector<16xf32> to vector<16x1xf32>
      %36 = arith.addf %33, %35 : vector<16x1xf32>
      %c0_27 = arith.constant 0 : index
      %c0_28 = arith.constant 0 : index
      %37 = vector.load %arg9[%c0_27, %c0_28] : memref<16x1xf32, #tpu.memory_space<vmem>>, vector<16x1xf32>
      tpu.vector_store %arg9[%c0_27, %c0_28], %36 {strides = array<i32>} : memref<16x1xf32, #tpu.memory_space<vmem>>, vector<16x1xf32>,
    } else {
    }
    %c128_i32_7 = arith.constant 128 : i32
    %11 = arith.cmpi slt, %7, %c128_i32_7 : i32
    %12 = arith.extui %11 : i1 to i32
    %c0_i32_8 = arith.constant 0 : i32
    %13 = arith.cmpi ne, %12, %c0_i32_8 : i32
    scf.if %13 {
      %17 = tpu.iota {dimensions = array<i32: 1>} : vector<16x128xi32>
      %18 = vector.broadcast %7 : i32 to vector<16x128xi32>
      %19 = arith.cmpi slt, %17, %18 : vector<16x128xi32>
      %cst = arith.constant 0.000000e+00 : f32
      %20 = vector.broadcast %cst : f32 to vector<16x128xf32>
      %21 = arith.select %19, %3, %20 : vector<16x128xi1>, vector<16x128xf32>
      %cst_10 = arith.constant 0.000000e+00 : f32
      %22 = vector.broadcast %cst_10 : f32 to vector<16x128xf32>
      %23 = arith.select %19, %4, %22 : vector<16x128xi1>, vector<16x128xf32>
      %c0_11 = arith.constant 0 : index
      %c0_12 = arith.constant 0 : index
      %24 = vector.load %arg6[%c0_11, %c0_12] : memref<16x16xf32, #tpu.memory_space<vmem>>, vector<16x16xf32>
      %cst_13 = arith.constant dense<0.000000e+00> : vector<16x16xf32>
      %25 = tpu.matmul %21, %23, %cst_13 {dimension_numbers = #tpu.dot_dimension_numbers<[1], [1], [0], [0], [0, 0, 1, 0], [], []>} : vector<16x128xf32>, vector<16x128xf32>, vector<16x16xf32> -> vector<16x16xf32>
      %26 = arith.addf %24, %25 : vector<16x16xf32>
      %c0_14 = arith.constant 0 : index
      %c0_15 = arith.constant 0 : index
      %27 = vector.load %arg6[%c0_14, %c0_15] : memref<16x16xf32, #tpu.memory_space<vmem>>, vector<16x16xf32>
      tpu.vector_store %arg6[%c0_14, %c0_15], %26 {strides = array<i32>} : memref<16x16xf32, #tpu.memory_space<vmem>>, vector<16x16xf32>,
      %c0_16 = arith.constant 0 : index
      %c0_17 = arith.constant 0 : index
      %28 = vector.load %arg7[%c0_16, %c0_17] : memref<16x1xf32, #tpu.memory_space<vmem>>, vector<16x1xf32>
      %29 = arith.mulf %21, %21 : vector<16x128xf32>
      %cst_18 = arith.constant dense<0.000000e+00> : vector<16xf32>
      %30 = vector.multi_reduction <add>, %29, %cst_18 [1] : vector<16x128xf32> to vector<16xf32>
      %31 = vector.shape_cast %30 : vector<16xf32> to vector<16x1xf32>
      %32 = arith.addf %28, %31 : vector<16x1xf32>
      %c0_19 = arith.constant 0 : index
      %c0_20 = arith.constant 0 : index
      %33 = vector.load %arg7[%c0_19, %c0_20] : memref<16x1xf32, #tpu.memory_space<vmem>>, vector<16x1xf32>
      tpu.vector_store %arg7[%c0_19, %c0_20], %32 {strides = array<i32>} : memref<16x1xf32, #tpu.memory_space<vmem>>, vector<16x1xf32>,
      %c0_21 = arith.constant 0 : index
      %c0_22 = arith.constant 0 : index
      %34 = vector.load %arg8[%c0_21, %c0_22] : memref<16x1xf32, #tpu.memory_space<vmem>>, vector<16x1xf32>
      %35 = arith.mulf %23, %23 : vector<16x128xf32>
      %cst_23 = arith.constant dense<0.000000e+00> : vector<16xf32>
      %36 = vector.multi_reduction <add>, %35, %cst_23 [1] : vector<16x128xf32> to vector<16xf32>
      %37 = vector.shape_cast %36 : vector<16xf32> to vector<16x1xf32>
      %38 = arith.addf %34, %37 : vector<16x1xf32>
      %c0_24 = arith.constant 0 : index
      %c0_25 = arith.constant 0 : index
      %39 = vector.load %arg8[%c0_24, %c0_25] : memref<16x1xf32, #tpu.memory_space<vmem>>, vector<16x1xf32>
      tpu.vector_store %arg8[%c0_24, %c0_25], %38 {strides = array<i32>} : memref<16x1xf32, #tpu.memory_space<vmem>>, vector<16x1xf32>,
      %c0_26 = arith.constant 0 : index
      %c0_27 = arith.constant 0 : index
      %40 = vector.load %arg9[%c0_26, %c0_27] : memref<16x1xf32, #tpu.memory_space<vmem>>, vector<16x1xf32>
      %cst_28 = arith.constant dense<0.000000e+00> : vector<16xf32>
      %41 = vector.multi_reduction <add>, %21, %cst_28 [1] : vector<16x128xf32> to vector<16xf32>
      %42 = vector.shape_cast %41 : vector<16xf32> to vector<16x1xf32>
      %43 = arith.addf %40, %42 : vector<16x1xf32>
      %c0_29 = arith.constant 0 : index
      %c0_30 = arith.constant 0 : index
      %44 = vector.load %arg9[%c0_29, %c0_30] : memref<16x1xf32, #tpu.memory_space<vmem>>, vector<16x1xf32>
      tpu.vector_store %arg9[%c0_29, %c0_30], %43 {strides = array<i32>} : memref<16x1xf32, #tpu.memory_space<vmem>>, vector<16x1xf32>,
    } else {
    }
    %c3_i32 = arith.constant 3 : i32
    %14 = arith.cmpi eq, %arg0, %c3_i32 : i32
    %15 = arith.extui %14 : i1 to i32
    %c0_i32_9 = arith.constant 0 : i32
    %16 = arith.cmpi ne, %15, %c0_i32_9 : i32
    scf.if %16 {
      %c0_10 = arith.constant 0 : index
      %c0_11 = arith.constant 0 : index
      %17 = vector.load %arg7[%c0_10, %c0_11] : memref<16x1xf32, #tpu.memory_space<vmem>>, vector<16x1xf32>
      %18 = math.sqrt %17 : vector<16x1xf32>
      %cst = arith.constant 9.99999996E-13 : f32
      %19 = vector.broadcast %cst : f32 to vector<16x1xf32>
      %20 = arith.maximumf %18, %19 : vector<16x1xf32>
      %cst_12 = arith.constant 1.000000e+00 : f32
      %21 = vector.broadcast %cst_12 : f32 to vector<16x1xf32>
      %22 = arith.divf %21, %20 : vector<16x1xf32>
      %c0_13 = arith.constant 0 : index
      %c0_14 = arith.constant 0 : index
      %23 = vector.load %arg8[%c0_13, %c0_14] : memref<16x1xf32, #tpu.memory_space<vmem>>, vector<16x1xf32>
      %24 = math.sqrt %23 : vector<16x1xf32>
      %cst_15 = arith.constant 9.99999996E-13 : f32
      %25 = vector.broadcast %cst_15 : f32 to vector<16x1xf32>
      %26 = arith.maximumf %24, %25 : vector<16x1xf32>
      %cst_16 = arith.constant 1.000000e+00 : f32
      %27 = vector.broadcast %cst_16 : f32 to vector<16x1xf32>
      %28 = arith.divf %27, %26 : vector<16x1xf32>
      %29 = tpu.iota {dimensions = array<i32: 0>} : vector<16x16xi32>
      %30 = tpu.iota {dimensions = array<i32: 1>} : vector<16x16xi32>
      %31 = arith.cmpi eq, %29, %30 : vector<16x16xi32>
      %32 = arith.extui %31 : vector<16x16xi1> to vector<16x16xi32>
      %33 = arith.sitofp %32 : vector<16x16xi32> to vector<16x16xf32>
      %34 = vector.broadcast %28 : vector<16x1xf32> to vector<16x16xf32>
      %35 = arith.mulf %33, %34 : vector<16x16xf32>
      %c0_17 = arith.constant 0 : index
      %c0_18 = arith.constant 0 : index
      %36 = vector.load %arg6[%c0_17, %c0_18] : memref<16x16xf32, #tpu.memory_space<vmem>>, vector<16x16xf32>
      %37 = vector.broadcast %22 : vector<16x1xf32> to vector<16x16xf32>
      %38 = arith.mulf %36, %37 : vector<16x16xf32>
      %cst_19 = arith.constant dense<0.000000e+00> : vector<16x16xf32>
      %39 = tpu.matmul %38, %35, %cst_19 {dimension_numbers = #tpu.dot_dimension_numbers<[1], [0], [0], [1], [0, 0, 1, 1], [], []>} : vector<16x16xf32>, vector<16x16xf32>, vector<16x16xf32> -> vector<16x16xf32>
      %cst_20 = arith.constant dense<0xFF800000> : vector<16xf32>
      %40 = vector.multi_reduction <maximumf>, %39, %cst_20 [1] : vector<16x16xf32> to vector<16xf32>
      %41 = vector.shape_cast %40 : vector<16xf32> to vector<16x1xf32>
      %42 = vector.broadcast %41 : vector<16x1xf32> to vector<16x16xf32>
      %43 = arith.subf %39, %42 : vector<16x16xf32>
      %44 = math.exp %43 : vector<16x16xf32>
      %cst_21 = arith.constant dense<0.000000e+00> : vector<16xf32>
      %45 = vector.multi_reduction <add>, %44, %cst_21 [1] : vector<16x16xf32> to vector<16xf32>
      %46 = vector.shape_cast %45 : vector<16xf32> to vector<16x1xf32>
      %47 = math.log %46 : vector<16x1xf32>
      %48 = arith.addf %41, %47 : vector<16x1xf32>
      %49 = arith.mulf %39, %33 : vector<16x16xf32>
      %cst_22 = arith.constant dense<0.000000e+00> : vector<16xf32>
      %50 = vector.multi_reduction <add>, %49, %cst_22 [1] : vector<16x16xf32> to vector<16xf32>
      %51 = vector.shape_cast %50 : vector<16xf32> to vector<16x1xf32>
      %52 = arith.subf %48, %51 : vector<16x1xf32>
      %53 = vector.shape_cast %52 : vector<16x1xf32> to vector<1x16x1xf32>
      %cst_23 = arith.constant dense<0.000000e+00> : vector<1xf32>
      %54 = vector.multi_reduction <add>, %53, %cst_23 [1, 2] : vector<1x16x1xf32> to vector<1xf32>
      %55 = vector.shape_cast %54 : vector<1xf32> to vector<1x1x1xf32>
      %56 = vector.extract %55[0, 0, 0] : f32 from vector<1x1x1xf32>
      %cst_24 = arith.constant 6.250000e-02 : f32
      %57 = arith.mulf %56, %cst_24 : f32
      %c0_25 = arith.constant 0 : index
      %c0_26 = arith.constant 0 : index
      %58 = vector.load %arg9[%c0_25, %c0_26] : memref<16x1xf32, #tpu.memory_space<vmem>>, vector<16x1xf32>
      %59 = vector.shape_cast %58 : vector<16x1xf32> to vector<1x16x1xf32>
      %cst_27 = arith.constant dense<0.000000e+00> : vector<1xf32>
      %60 = vector.multi_reduction <add>, %59, %cst_27 [1, 2] : vector<1x16x1xf32> to vector<1xf32>
      %61 = vector.shape_cast %60 : vector<1xf32> to vector<1x1x1xf32>
      %62 = vector.extract %61[0, 0, 0] : f32 from vector<1x1x1xf32>
      %63 = vector.broadcast %62 : f32 to vector<16x1xf32>
      %64 = arith.divf %58, %63 : vector<16x1xf32>
      %cst_28 = arith.constant 9.99999996E-13 : f32
      %65 = vector.broadcast %cst_28 : f32 to vector<16x1xf32>
      %66 = arith.maximumf %64, %65 : vector<16x1xf32>
      %67 = math.log %66 : vector<16x1xf32>
      %68 = arith.mulf %64, %67 : vector<16x1xf32>
      %69 = vector.shape_cast %68 : vector<16x1xf32> to vector<1x16x1xf32>
      %cst_29 = arith.constant dense<0.000000e+00> : vector<1xf32>
      %70 = vector.multi_reduction <add>, %69, %cst_29 [1, 2] : vector<1x16x1xf32> to vector<1xf32>
      %71 = vector.shape_cast %70 : vector<1xf32> to vector<1x1x1xf32>
      %72 = vector.extract %71[0, 0, 0] : f32 from vector<1x1x1xf32>
      %cst_30 = arith.constant 2.77258873 : f32
      %73 = arith.addf %cst_30, %72 : f32
      %c0_31 = arith.constant 0 : index
      %74 = memref.load %arg1[%c0_31] : memref<1xf32, #tpu.memory_space<smem>>
      %75 = arith.mulf %74, %73 : f32
      %76 = arith.addf %57, %75 : f32
      %c0_32 = arith.constant 0 : index
      %77 = memref.load %arg5[%c0_32] : memref<1xf32, #tpu.memory_space<smem>>
      memref.store %76, %arg5[%c0_32] : memref<1xf32, #tpu.memory_space<smem>>
    } else {
    }
    return
  }
  func.func @transform_0(%arg0: i32) -> i32 {
    %c0_i32 = arith.constant 0 : i32
    %c0_i32_0 = arith.constant 0 : i32
    return %c0_i32 : i32
  }
  func.func @transform_1(%arg0: i32) -> i32 {
    %c0_i32 = arith.constant 0 : i32
    %c0_i32_0 = arith.constant 0 : i32
    return %c0_i32 : i32
  }
  func.func @transform_2(%arg0: i32) -> (i32, i32) {
    %c0_i32 = arith.constant 0 : i32
    %c0_i32_0 = arith.constant 0 : i32
    return %c0_i32, %arg0 : i32, i32
  }
  func.func @transform_3(%arg0: i32) -> (i32, i32) {
    %c0_i32 = arith.constant 0 : i32
    %c0_i32_0 = arith.constant 0 : i32
    return %c0_i32, %arg0 : i32, i32
  }
  func.func @transform_4(%arg0: i32) -> i32 {
    %c0_i32 = arith.constant 0 : i32
    %c0_i32_0 = arith.constant 0 : i32
    return %c0_i32 : i32
  }
}

</mosaic_0001>

<llo_original>
// kernel: tpu_custom_call.1
$region0: #{tpu_custom_call.1}
  #allocation0 [shape = 'u32[]', space=smem, size = 0x4, offset = 0x4, fixed_abs, tag = 'smem constant byte address 0x4 - core index']
  #allocation1 [shape = 'u32[144,128]{1,0:T(1,128)}', space=vmem, size = 0x12000, scoped, tag = 'internal scratch']
  #allocation2 [shape = 'f32[16,16]{1,0:T(8,128)}', space=vmem, size = 0x2000, scoped, tag = 'scratch operand']
  #allocation3 [shape = 'f32[16,1]{1,0:T(8,128)}', space=vmem, size = 0x2000, scoped, tag = 'scratch operand']
  #allocation4 [shape = 'f32[16,1]{1,0:T(8,128)}', space=vmem, size = 0x2000, scoped, tag = 'scratch operand']
  #allocation5 [shape = 'f32[16,1]{1,0:T(8,128)}', space=vmem, size = 0x2000, scoped, tag = 'scratch operand']
  #allocation6 [shape = 'f32[1]{0:T(128)S(6)}', space=smem, size = 0x200, scoped, tag = 'scoped memory for tpu_custom_call.1']
  #allocation7 [shape = 's32[1]{0:T(128)S(6)}', space=smem, size = 0x200, scoped, tag = 'scoped memory for tpu_custom_call.1']
  %s0 = inlined_call_operand.<no memory space> [shape: f32[1], index: 0, kind: input, shape index: {}]
  %s1 = inlined_call_operand.<no memory space> [shape: s32[1], index: 1, kind: input, shape index: {}]
  %s2 = inlined_call_operand.hbm [shape: f32[16,500], index: 2, kind: input, shape index: {}]
  %s3 = inlined_call_operand.hbm [shape: f32[16,500], index: 3, kind: input, shape index: {}]
  %s4 = inlined_call_operand.hbm [shape: f32[1], index: 4, kind: output, shape index: {}]
  %s5 = sld [smem:[#allocation0]]
  $region73: #{tpu_custom_call.1} parent=0
    _
  %s7 = ssub.s32 1, %s5
  %s8 = scalar_select 0, %s7, %s5
  %9 = sst [smem:[#allocation6]] %s0
  %10 = sst [smem:[#allocation7]] %s1
  $region1: #{tpu_custom_call.1} parent=0
    #allocation8 [shape = 'u8[16384]{0}', space=vmem, size = 0x4000, scoped, tag = 'input window, operand 2']
    #allocation9 [shape = 's32[2]{0}', space=sflag, size = 0x8, scoped, tag = 'scoped memory for tpu_custom_call.1']
    #allocation10 [shape = 's32[2]{0}', space=sflag, size = 0x8, scoped, tag = 'scoped memory for tpu_custom_call.1']
    #allocation11 [shape = 'u8[16384]{0}', space=vmem, size = 0x4000, scoped, tag = 'input window, operand 3']
    #allocation12 [shape = 's32[2]{0}', space=sflag, size = 0x8, scoped, tag = 'scoped memory for tpu_custom_call.1']
    #allocation13 [shape = 'u8[512]{0}', space=smem, size = 0x200, scoped, tag = 'output window, operand 0, single buffered']
    %11 = vsyncpa [#allocation9], 0
    %s12 = scalar_lea.sflag [#allocation9], 1
    %13 = vsyncpa %s12, 0
    %14 = vsyncpa [#allocation12], 0
    %s15 = scalar_lea.sflag [#allocation12], 1
    %16 = vsyncpa %s15, 0
    %17 = vsyncpa [#allocation10], 0
    loop: start=0, step=1, limit=6
    $region2: #{tpu_custom_call.1} parent=1 // loop_pre_header
      _
    $region3: #{tpu_custom_call.1} parent=1 // loop_header
      %s19 = sphi 0, %s23
      %p20 = scmp.ge.s32.totalorder %s19, 6
      %s27 = sphi 0, %s27
      %s29 = sphi 0, %s27
      %s30 = sphi 0, %s29
      %s44 = sphi 0, %s30
      %s48 = sphi 0, %s48
      %s50 = sphi 0, %s48
      %s51 = sphi 0, %s50
      %s65 = sphi 0, %s51
      %s71 = sphi 0, %s73
      %s74 = sphi 0, %s71
      %s75 = sphi 0, %s74
      %s91 = sphi 0, %s75
      %s97 = sphi 0, %s99
      %s100 = sphi 0, %s97
      %s101 = sphi 0, %s100
      %s117 = sphi 0, %s101
      %s121 = sphi 0, %s121
      %s123 = sphi 0, %s121
      %s124 = sphi 0, %s123
      %s138 = sphi 0, %s124
    $region4: #{tpu_custom_call.1} parent=1 // loop_header_branch
      %22 = sbr.rel (%p20) target = $region8
    $region5: #{tpu_custom_call.1} parent=1 // loop_body
      %s24 = ssub.s32 %s19, 1
      %s25 = ssub.s32 %s19, 2
      %s26 = sadd.s32 %s19, 1
      %s28 = sadd.s32 %s27, 1
      %p31 = scmp.eq.s32.totalorder %s19, 3
      %p32 = scmp.ne.s32.totalorder %s27, %s29
      %p33 = scmp.eq.s32.totalorder %s19, 0
      %p34 = por %p32, %p33
      %p35 = scmp.ne.s32.totalorder %s27, %s29
      %p36 = scmp.eq.s32.totalorder %s24, 3
      %p37 = por %p35, %p36
      %p38 = scmp.ne.s32.totalorder %s29, %s30
      %p39 = scmp.eq.s32.totalorder %s24, 0
      %p40 = por %p38, %p39
      %p41 = scmp.ne.s32.totalorder %s29, %s30
      %p42 = scmp.eq.s32.totalorder %s25, 3
      %p43 = por %p41, %p42
      %p45 = scmp.ne.s32.totalorder %s30, %s44
      %p46 = scmp.eq.s32.totalorder %s25, 0
      %p47 = por %p45, %p46
      %s49 = sadd.s32 %s48, 1
      %p52 = scmp.eq.s32.totalorder %s19, 3
      %p53 = scmp.ne.s32.totalorder %s48, %s50
      %p54 = scmp.eq.s32.totalorder %s19, 0
      %p55 = por %p53, %p54
      %p56 = scmp.ne.s32.totalorder %s48, %s50
      %p57 = scmp.eq.s32.totalorder %s24, 3
      %p58 = por %p56, %p57
      %p59 = scmp.ne.s32.totalorder %s50, %s51
      %p60 = scmp.eq.s32.totalorder %s24, 0
      %p61 = por %p59, %p60
      %p62 = scmp.ne.s32.totalorder %s50, %s51
      %p63 = scmp.eq.s32.totalorder %s25, 3
      %p64 = por %p62, %p63
      %p66 = scmp.ne.s32.totalorder %s51, %s65
      %p67 = scmp.eq.s32.totalorder %s25, 0
      %p68 = por %p66, %p67
      %s69 = ssub.s32 %s19, %s26
      %p70 = scmp.eq.s32.totalorder %s69, 0
      %s72 = sadd.s32 %s71, 1
      %s73 = scalar_select %p70, %s71, %s72
      %p76 = pneg %p70
      %p77 = scmp.eq.s32.totalorder %s19, 3
      %p78 = por %p76, %p77
      %p79 = scmp.ne.s32.totalorder %s71, %s74
      %p80 = scmp.eq.s32.totalorder %s19, 0
      %p81 = por %p79, %p80
      %p82 = scmp.ne.s32.totalorder %s71, %s74
      %p83 = scmp.eq.s32.totalorder %s24, 3
      %p84 = por %p82, %p83
      %p85 = scmp.ne.s32.totalorder %s74, %s75
      %p86 = scmp.eq.s32.totalorder %s24, 0
      %p87 = por %p85, %p86
      %p88 = scmp.ne.s32.totalorder %s74, %s75
      %p89 = scmp.eq.s32.totalorder %s25, 3
      %p90 = por %p88, %p89
      %p92 = scmp.ne.s32.totalorder %s75, %s91
      %p93 = scmp.eq.s32.totalorder %s25, 0
      %p94 = por %p92, %p93
      %s95 = ssub.s32 %s19, %s26
      %p96 = scmp.eq.s32.totalorder %s95, 0
      %s98 = sadd.s32 %s97, 1
      %s99 = scalar_select %p96, %s97, %s98
      %p102 = pneg %p96
      %p103 = scmp.eq.s32.totalorder %s19, 3
      %p104 = por %p102, %p103
      %p105 = scmp.ne.s32.totalorder %s97, %s100
      %p106 = scmp.eq.s32.totalorder %s19, 0
      %p107 = por %p105, %p106
      %p108 = scmp.ne.s32.totalorder %s97, %s100
      %p109 = scmp.eq.s32.totalorder %s24, 3
      %p110 = por %p108, %p109
      %p111 = scmp.ne.s32.totalorder %s100, %s101
      %p112 = scmp.eq.s32.totalorder %s24, 0
      %p113 = por %p111, %p112
      %p114 = scmp.ne.s32.totalorder %s100, %s101
      %p115 = scmp.eq.s32.totalorder %s25, 3
      %p116 = por %p114, %p115
      %p118 = scmp.ne.s32.totalorder %s101, %s117
      %p119 = scmp.eq.s32.totalorder %s25, 0
      %p120 = por %p118, %p119
      %s122 = sadd.s32 %s121, 1
      %p125 = scmp.eq.s32.totalorder %s19, 3
      %p126 = scmp.ne.s32.totalorder %s121, %s123
      %p127 = scmp.eq.s32.totalorder %s19, 0
      %p128 = por %p126, %p127
      %p129 = scmp.ne.s32.totalorder %s121, %s123
      %p130 = scmp.eq.s32.totalorder %s24, 3
      %p131 = por %p129, %p130
      %p132 = scmp.ne.s32.totalorder %s123, %s124
      %p133 = scmp.eq.s32.totalorder %s24, 0
      %p134 = por %p132, %p133
      %p135 = scmp.ne.s32.totalorder %s123, %s124
      %p136 = scmp.eq.s32.totalorder %s25, 3
      %p137 = por %p135, %p136
      %p139 = scmp.ne.s32.totalorder %s124, %s138
      %p140 = scmp.eq.s32.totalorder %s25, 0
      %p141 = por %p139, %p140
      %p142 = scmp.le.s32.totalorder 1, %s19
      %p143 = scmp.lt.s32.totalorder %s19, 5
      %p144 = pnand %p142, %p143
      %p145 = pneg %p144
      // Predicated region
      $region9: #{tpu_custom_call.1} parent=5 // pred_check
        _
      $region10: #{tpu_custom_call.1} parent=5 // pred_check_branch
        %147 = sbr.rel (%p144) target = $region12
      $region11: #{tpu_custom_call.1} parent=5 // pred_region
        %s148 = ssub.s32 %s19, 1
        // Predicated region
        $region13: #{tpu_custom_call.1} parent=11 // pred_check
          %p149 = pneg %p40
        $region14: #{tpu_custom_call.1} parent=11 // pred_check_branch
          %151 = sbr.rel (%p149) target = $region16
        $region15: #{tpu_custom_call.1} parent=11 // pred_region
          _
        $region16: #{tpu_custom_call.1} parent=11 // pred_fallthru
          _
        // Predicated region
        $region17: #{tpu_custom_call.1} parent=11 // pred_check
          %p152 = pneg %p61
        $region18: #{tpu_custom_call.1} parent=11 // pred_check_branch
          %154 = sbr.rel (%p152) target = $region20
        $region19: #{tpu_custom_call.1} parent=11 // pred_region
          _
        $region20: #{tpu_custom_call.1} parent=11 // pred_fallthru
          _
      $region12: #{tpu_custom_call.1} parent=5 // pred_fallthru
        _
      %p155 = scmp.lt.s32.totalorder %s19, 4
      // Predicated region
      $region21: #{tpu_custom_call.1} parent=5 // pred_check
        %p156 = pneg %p155
      $region22: #{tpu_custom_call.1} parent=5 // pred_check_branch
        %158 = sbr.rel (%p156) target = $region24
      $region23: #{tpu_custom_call.1} parent=5 // pred_region
        // Predicated region
        $region25: #{tpu_custom_call.1} parent=23 // pred_check
          %p159 = pneg %p81
        $region26: #{tpu_custom_call.1} parent=23 // pred_check_branch
          %161 = sbr.rel (%p159) target = $region28
        $region27: #{tpu_custom_call.1} parent=23 // pred_region
          %s162 = sand.u32 %s71, 1
          %s163 = scalar_lea.sflag [#allocation9], %s162
          %s164 = sand.u32 %s71, 1
          %s165 = smul.addr %s164, 16
          %s166 = scalar_lea.vmem [#allocation8], %s165
          %s168 = ssub.s32 256, 256
          %169 = vsyncadd %s163, %s168
          %s170 = smul.addr %s19, 128
          %s171 = scalar_lea.hbm %s2, %s170
          %s172 = sshll.u32 %s166, 4
          %s173 = int_to_ptr.vmem [resolvable:$true] %s172
          %178 = dma.hbm_to_vmem [thread:$0]  %s171, 256, %s173, %s163, 512, 128, 8
        $region28: #{tpu_custom_call.1} parent=23 // pred_fallthru
          _
        // Predicated region
        $region29: #{tpu_custom_call.1} parent=23 // pred_check
          %p179 = pneg %p107
        $region30: #{tpu_custom_call.1} parent=23 // pred_check_branch
          %181 = sbr.rel (%p179) target = $region32
        $region31: #{tpu_custom_call.1} parent=23 // pred_region
          %s182 = sand.u32 %s97, 1
          %s183 = scalar_lea.sflag [#allocation12], %s182
          %s184 = sand.u32 %s97, 1
          %s185 = smul.addr %s184, 16
          %s186 = scalar_lea.vmem [#allocation11], %s185
          %s188 = ssub.s32 256, 256
          %189 = vsyncadd %s183, %s188
          %s190 = smul.addr %s19, 128
          %s191 = scalar_lea.hbm %s3, %s190
          %s192 = sshll.u32 %s186, 4
          %s193 = int_to_ptr.vmem [resolvable:$true] %s192
          %198 = dma.hbm_to_vmem [thread:$0]  %s191, 256, %s193, %s183, 512, 128, 8
        $region32: #{tpu_custom_call.1} parent=23 // pred_fallthru
          _
      $region24: #{tpu_custom_call.1} parent=5 // pred_fallthru
        _
      %p199 = scmp.le.s32.totalorder 1, %s19
      %p200 = scmp.lt.s32.totalorder %s19, 5
      %p201 = pnand %p199, %p200
      %p202 = pneg %p201
      // Predicated region
      $region33: #{tpu_custom_call.1} parent=5 // pred_check
        _
      $region34: #{tpu_custom_call.1} parent=5 // pred_check_branch
        %204 = sbr.rel (%p201) target = $region36
      $region35: #{tpu_custom_call.1} parent=5 // pred_region
        %s205 = ssub.s32 %s19, 1
        %s206 = sand.u32 %s74, 1
        %s207 = scalar_lea.sflag [#allocation9], %s206
        %s208 = sand.u32 %s74, 1
        %s209 = smul.addr %s208, 16
        %s210 = scalar_lea.vmem [#allocation8], %s209
        // Predicated region
        $region37: #{tpu_custom_call.1} parent=35 // pred_check
          %p211 = pneg %p87
        $region38: #{tpu_custom_call.1} parent=35 // pred_check_branch
          %213 = sbr.rel (%p211) target = $region40
        $region39: #{tpu_custom_call.1} parent=35 // pred_region
          %214 = dma.done %s207, 256
        $region40: #{tpu_custom_call.1} parent=35 // pred_fallthru
          _
        %s215 = sand.u32 %s100, 1
        %s216 = scalar_lea.sflag [#allocation12], %s215
        %s217 = sand.u32 %s100, 1
        %s218 = smul.addr %s217, 16
        %s219 = scalar_lea.vmem [#allocation11], %s218
        // Predicated region
        $region41: #{tpu_custom_call.1} parent=35 // pred_check
          %p220 = pneg %p113
        $region42: #{tpu_custom_call.1} parent=35 // pred_check_branch
          %222 = sbr.rel (%p220) target = $region44
        $region43: #{tpu_custom_call.1} parent=35 // pred_region
          %223 = dma.done %s216, 256
        $region44: #{tpu_custom_call.1} parent=35 // pred_fallthru
          _
        %p224 = pneg %p40
        %p225 = pneg %p37
        %p226 = pneg %p61
        %p227 = pneg %p58
        %s228 = sand.u32 %s74, 1
        %s229 = scalar_lea.sflag [#allocation9], %s228
        %s230 = sand.u32 %s74, 1
        %s231 = smul.addr %s230, 16
        %s232 = scalar_lea.vmem [#allocation8], %s231
        %p233 = pneg %p87
        %p234 = pneg %p84
        %s235 = sand.u32 %s100, 1
        %s236 = scalar_lea.sflag [#allocation12], %s235
        %s237 = sand.u32 %s100, 1
        %s238 = smul.addr %s237, 16
        %s239 = scalar_lea.vmem [#allocation11], %s238
        %p240 = pneg %p113
        %p241 = pneg %p110
        %p242 = pneg %p134
        %p243 = pneg %p131
        %p244 = scmp.eq.s32.totalorder %s24, 0
        // Predicated region
        $region45: #{tpu_custom_call.1} parent=35 // pred_check
          %p245 = pneg %p244
        $region46: #{tpu_custom_call.1} parent=35 // pred_check_branch
          %247 = sbr.rel (%p245) target = $region48
        $region47: #{tpu_custom_call.1} parent=35 // pred_region
          %vm248 = vcmask 130048
          %249 = vst.msk [vmem:[#allocation2] sm:$0xff] %vm248, 0.0
          %250 = vst.msk [vmem:[#allocation2 + $0x8] sm:$0xff] %vm248, 0.0
          %vm251 = vcmask 7168
          %252 = vst.msk [vmem:[#allocation3] sm:$0xff] %vm251, 0.0
          %253 = vst.msk [vmem:[#allocation3 + $0x8] sm:$0xff] %vm251, 0.0
          %254 = vst.msk [vmem:[#allocation4] sm:$0xff] %vm251, 0.0
          %255 = vst.msk [vmem:[#allocation4 + $0x8] sm:$0xff] %vm251, 0.0
          %256 = vst.msk [vmem:[#allocation5] sm:$0xff] %vm251, 0.0
          %257 = vst.msk [vmem:[#allocation5 + $0x8] sm:$0xff] %vm251, 0.0
        $region48: #{tpu_custom_call.1} parent=35 // pred_fallthru
          _
        %v258 = vld [vmem:[%s210] sm:$0xff]
        %v259 = vld [vmem:[%s210 + $0x8] sm:$0xff]
        %v260 = vld [vmem:[%s219] sm:$0xff]
        %v261 = vld [vmem:[%s219 + $0x8] sm:$0xff]
        %s262 = sld [smem:[#allocation7]]
        %s263 = smul.u32 %s24, 128
        %s264 = ssub.s32 %s262, %s263
        %p265 = scmp.ge.s32.totalorder %s264, 128
        // Predicated region
        $region49: #{tpu_custom_call.1} parent=35 // pred_check
          %p266 = pneg %p265
        $region50: #{tpu_custom_call.1} parent=35 // pred_check_branch
          %268 = sbr.rel (%p266) target = $region52
        $region51: #{tpu_custom_call.1} parent=35 // pred_region
          %v269 = vld [vmem:[#allocation2] sm:$0xff]
          %v270 = vld [vmem:[#allocation2 + $0x8] sm:$0xff]
          %271 = vmatprep.subr.mxu0 0.0
          %272 = vmatpush1.xpose.msra.mxu0 0.0
          %273 = vmatprep.subr.mxu0 0.0
          %274 = vmatpush1.xpose.msra.mxu0 0.0
          %275 = vmatprep.subr.mxu0 0.0
          %276 = vmatpush1.xpose.msra.mxu0 0.0
          %277 = vmatprep.subr.mxu0 0.0
          %278 = vmatpush1.xpose.msra.mxu0 0.0
          %279 = vmatprep.subr.mxu0 0.0
          %280 = vmatpush1.xpose.msra.mxu0 0.0
          %281 = vmatprep.subr.mxu0 0.0
          %282 = vmatpush1.xpose.msra.mxu0 0.0
          %283 = vmatprep.subr.mxu0 0.0
          %284 = vmatpush1.xpose.msra.mxu0 0.0
          %285 = vmatprep.subr.mxu0 0.0
          %286 = vmatpush1.xpose.msra.mxu0 0.0
          %287 = vmatprep.subr.mxu0 0.0
          %288 = vmatpush1.xpose.msra.mxu0 0.0
          %289 = vmatprep.subr.mxu0 0.0
          %290 = vmatpush1.xpose.msra.mxu0 0.0
          %291 = vmatprep.subr.mxu0 0.0
          %292 = vmatpush1.xpose.msra.mxu0 0.0
          %293 = vmatprep.subr.mxu0 0.0
          %294 = vmatpush1.xpose.msra.mxu0 0.0
          %295 = vmatprep.subr.mxu0 0.0
          %296 = vmatpush1.xpose.msra.mxu0 0.0
          %297 = vmatprep.subr.mxu0 0.0
          %298 = vmatpush1.xpose.msra.mxu0 0.0
          %299 = vmatprep.subr.mxu0 0.0
          %300 = vmatpush1.xpose.msra.mxu0 %v261
          %301 = vmatprep.subr.mxu0 0.0
          %302 = vmatpush1.xpose.msra.mxu0 %v260
          %303 = vmatprep.subr.mxu0 0.0
          %304 = vmatpush2.xpose.msra.mxu0 0.0
          %305 = vmatprep.subr.mxu0 0.0
          %306 = vmatpush2.xpose.msra.mxu0 0.0
          %307 = vmatprep.subr.mxu0 0.0
          %308 = vmatpush2.xpose.msra.mxu0 0.0
          %309 = vmatprep.subr.mxu0 0.0
          %310 = vmatpush2.xpose.msra.mxu0 0.0
          %311 = vmatprep.subr.mxu0 0.0
          %312 = vmatpush2.xpose.msra.mxu0 0.0
          %313 = vmatprep.subr.mxu0 0.0
          %314 = vmatpush2.xpose.msra.mxu0 0.0
          %315 = vmatprep.subr.mxu0 0.0
          %316 = vmatpush2.xpose.msra.mxu0 0.0
          %317 = vmatprep.subr.mxu0 0.0
          %318 = vmatpush2.xpose.msra.mxu0 0.0
          %319 = vmatprep.subr.mxu0 0.0
          %320 = vmatpush2.xpose.msra.mxu0 0.0
          %321 = vmatprep.subr.mxu0 0.0
          %322 = vmatpush2.xpose.msra.mxu0 0.0
          %323 = vmatprep.subr.mxu0 0.0
          %324 = vmatpush2.xpose.msra.mxu0 0.0
          %325 = vmatprep.subr.mxu0 0.0
          %326 = vmatpush2.xpose.msra.mxu0 0.0
          %327 = vmatprep.subr.mxu0 0.0
          %328 = vmatpush2.xpose.msra.mxu0 0.0
          %329 = vmatprep.subr.mxu0 0.0
          %330 = vmatpush2.xpose.msra.mxu0 0.0
          %331 = vmatprep.subr.mxu0 0.0
          %332 = vmatpush2.xpose.msra.mxu0 0.0
          %333 = vmatprep.subr.mxu0 0.0
          %334 = vmatpush2.xpose.msra.mxu0 0.0
          %335 = vmatprep.mubr.f32.mxu0 0.0
          %336 = vmatmul.mubr.f32.gmra.mxu0 %v258
          %v337 = vpop.f32.mrf.mxu0
          %v338 = vadd.f32 0.0, %v337
          %v339 = vpop.f32.mrf.mxu0
          %340 = vmatprep.mubr.f32.mxu0 0.0
          %341 = vmatmul.mubr.f32.gmra.mxu0 %v259
          %v342 = vpop.f32.mrf.mxu0
          %v343 = vadd.f32 0.0, %v342
          %v344 = vpop.f32.mrf.mxu0
          %345 = vdwg.mxu0
          %v346 = vadd.f32 %v269, %v338
          %v347 = vadd.f32 %v270, %v343
          %vm348 = vcmask 130048
          %349 = vst.msk [vmem:[#allocation2] sm:$0xff] %vm348, %v346
          %350 = vst.msk [vmem:[#allocation2 + $0x8] sm:$0xff] %vm348, %v347
          %v351 = vld [vmem:[#allocation3] sm:$0xff]
          %v352 = vld [vmem:[#allocation3 + $0x8] sm:$0xff]
          %v353 = vmul.f32 %v258, %v258
          %v354 = vmul.f32 %v259, %v259
          %355 = vadd.xlane.f32.xlu0 %v353
          %v356 = vpop.xlane.xlu0 %355
          %357 = vadd.xlane.f32.xlu0 %v354
          %v358 = vpop.xlane.xlu0 %357
          %v359 = vadd.f32 %v351, %v356
          %v360 = vadd.f32 %v352, %v358
          %vm361 = vcmask 7168
          %362 = vst.msk [vmem:[#allocation3] sm:$0xff] %vm361, %v359
          %363 = vst.msk [vmem:[#allocation3 + $0x8] sm:$0xff] %vm361, %v360
          %v364 = vld [vmem:[#allocation4] sm:$0xff]
          %v365 = vld [vmem:[#allocation4 + $0x8] sm:$0xff]
          %v366 = vmul.f32 %v260, %v260
          %v367 = vmul.f32 %v261, %v261
          %368 = vadd.xlane.f32.xlu0 %v366
          %v369 = vpop.xlane.xlu0 %368
          %370 = vadd.xlane.f32.xlu0 %v367
          %v371 = vpop.xlane.xlu0 %370
          %v372 = vadd.f32 %v364, %v369
          %v373 = vadd.f32 %v365, %v371
          %374 = vst.msk [vmem:[#allocation4] sm:$0xff] %vm361, %v372
          %375 = vst.msk [vmem:[#allocation4 + $0x8] sm:$0xff] %vm361, %v373
          %v376 = vld [vmem:[#allocation5] sm:$0xff]
          %v377 = vld [vmem:[#allocation5 + $0x8] sm:$0xff]
          %378 = vadd.xlane.f32.xlu0 %v258
          %v379 = vpop.xlane.xlu0 %378
          %380 = vadd.xlane.f32.xlu0 %v259
          %v381 = vpop.xlane.xlu0 %380
          %v382 = vadd.f32 %v376, %v379
          %v383 = vadd.f32 %v377, %v381
          %384 = vst.msk [vmem:[#allocation5] sm:$0xff] %vm361, %v382
          %385 = vst.msk [vmem:[#allocation5 + $0x8] sm:$0xff] %vm361, %v383
        $region52: #{tpu_custom_call.1} parent=35 // pred_fallthru
          _
        %p386 = scmp.lt.s32.totalorder %s264, 128
        // Predicated region
        $region53: #{tpu_custom_call.1} parent=35 // pred_check
          %p387 = pneg %p386
        $region54: #{tpu_custom_call.1} parent=35 // pred_check_branch
          %389 = sbr.rel (%p387) target = $region56
        $region55: #{tpu_custom_call.1} parent=35 // pred_region
          %v390 = vlaneseq
          %v391 = vand.u32 %v390, 127
          %v392 = vstv %s264
          %vm393 = vcmp.lt.s32.totalorder %v391, %v392
          %v394 = vsel %vm393, %v258, 0.0
          %v395 = vsel %vm393, %v259, 0.0
          %v396 = vsel %vm393, %v260, 0.0
          %v397 = vsel %vm393, %v261, 0.0
          %v398 = vld [vmem:[#allocation2] sm:$0xff]
          %v399 = vld [vmem:[#allocation2 + $0x8] sm:$0xff]
          %400 = vmatprep.subr.mxu0 0.0
          %401 = vmatpush1.xpose.msra.mxu0 0.0
          %402 = vmatprep.subr.mxu0 0.0
          %403 = vmatpush1.xpose.msra.mxu0 0.0
          %404 = vmatprep.subr.mxu0 0.0
          %405 = vmatpush1.xpose.msra.mxu0 0.0
          %406 = vmatprep.subr.mxu0 0.0
          %407 = vmatpush1.xpose.msra.mxu0 0.0
          %408 = vmatprep.subr.mxu0 0.0
          %409 = vmatpush1.xpose.msra.mxu0 0.0
          %410 = vmatprep.subr.mxu0 0.0
          %411 = vmatpush1.xpose.msra.mxu0 0.0
          %412 = vmatprep.subr.mxu0 0.0
          %413 = vmatpush1.xpose.msra.mxu0 0.0
          %414 = vmatprep.subr.mxu0 0.0
          %415 = vmatpush1.xpose.msra.mxu0 0.0
          %416 = vmatprep.subr.mxu0 0.0
          %417 = vmatpush1.xpose.msra.mxu0 0.0
          %418 = vmatprep.subr.mxu0 0.0
          %419 = vmatpush1.xpose.msra.mxu0 0.0
          %420 = vmatprep.subr.mxu0 0.0
          %421 = vmatpush1.xpose.msra.mxu0 0.0
          %422 = vmatprep.subr.mxu0 0.0
          %423 = vmatpush1.xpose.msra.mxu0 0.0
          %424 = vmatprep.subr.mxu0 0.0
          %425 = vmatpush1.xpose.msra.mxu0 0.0
          %426 = vmatprep.subr.mxu0 0.0
          %427 = vmatpush1.xpose.msra.mxu0 0.0
          %428 = vmatprep.subr.mxu0 0.0
          %429 = vmatpush1.xpose.msra.mxu0 %v397
          %430 = vmatprep.subr.mxu0 0.0
          %431 = vmatpush1.xpose.msra.mxu0 %v396
          %432 = vmatprep.subr.mxu0 0.0
          %433 = vmatpush2.xpose.msra.mxu0 0.0
          %434 = vmatprep.subr.mxu0 0.0
          %435 = vmatpush2.xpose.msra.mxu0 0.0
          %436 = vmatprep.subr.mxu0 0.0
          %437 = vmatpush2.xpose.msra.mxu0 0.0
          %438 = vmatprep.subr.mxu0 0.0
          %439 = vmatpush2.xpose.msra.mxu0 0.0
          %440 = vmatprep.subr.mxu0 0.0
          %441 = vmatpush2.xpose.msra.mxu0 0.0
          %442 = vmatprep.subr.mxu0 0.0
          %443 = vmatpush2.xpose.msra.mxu0 0.0
          %444 = vmatprep.subr.mxu0 0.0
          %445 = vmatpush2.xpose.msra.mxu0 0.0
          %446 = vmatprep.subr.mxu0 0.0
          %447 = vmatpush2.xpose.msra.mxu0 0.0
          %448 = vmatprep.subr.mxu0 0.0
          %449 = vmatpush2.xpose.msra.mxu0 0.0
          %450 = vmatprep.subr.mxu0 0.0
          %451 = vmatpush2.xpose.msra.mxu0 0.0
          %452 = vmatprep.subr.mxu0 0.0
          %453 = vmatpush2.xpose.msra.mxu0 0.0
          %454 = vmatprep.subr.mxu0 0.0
          %455 = vmatpush2.xpose.msra.mxu0 0.0
          %456 = vmatprep.subr.mxu0 0.0
          %457 = vmatpush2.xpose.msra.mxu0 0.0
          %458 = vmatprep.subr.mxu0 0.0
          %459 = vmatpush2.xpose.msra.mxu0 0.0
          %460 = vmatprep.subr.mxu0 0.0
          %461 = vmatpush2.xpose.msra.mxu0 0.0
          %462 = vmatprep.subr.mxu0 0.0
          %463 = vmatpush2.xpose.msra.mxu0 0.0
          %464 = vmatprep.mubr.f32.mxu0 0.0
          %465 = vmatmul.mubr.f32.gmra.mxu0 %v394
          %v466 = vpop.f32.mrf.mxu0
          %v467 = vadd.f32 0.0, %v466
          %v468 = vpop.f32.mrf.mxu0
          %469 = vmatprep.mubr.f32.mxu0 0.0
          %470 = vmatmul.mubr.f32.gmra.mxu0 %v395
          %v471 = vpop.f32.mrf.mxu0
          %v472 = vadd.f32 0.0, %v471
          %v473 = vpop.f32.mrf.mxu0
          %474 = vdwg.mxu0
          %v475 = vadd.f32 %v398, %v467
          %v476 = vadd.f32 %v399, %v472
          %vm477 = vcmask 130048
          %478 = vst.msk [vmem:[#allocation2] sm:$0xff] %vm477, %v475
          %479 = vst.msk [vmem:[#allocation2 + $0x8] sm:$0xff] %vm477, %v476
          %v480 = vld [vmem:[#allocation3] sm:$0xff]
          %v481 = vld [vmem:[#allocation3 + $0x8] sm:$0xff]
          %v482 = vmul.f32 %v394, %v394
          %v483 = vmul.f32 %v395, %v395
          %484 = vadd.xlane.f32.xlu0 %v482
          %v485 = vpop.xlane.xlu0 %484
          %486 = vadd.xlane.f32.xlu0 %v483
          %v487 = vpop.xlane.xlu0 %486
          %v488 = vadd.f32 %v480, %v485
          %v489 = vadd.f32 %v481, %v487
          %vm490 = vcmask 7168
          %491 = vst.msk [vmem:[#allocation3] sm:$0xff] %vm490, %v488
          %492 = vst.msk [vmem:[#allocation3 + $0x8] sm:$0xff] %vm490, %v489
          %v493 = vld [vmem:[#allocation4] sm:$0xff]
          %v494 = vld [vmem:[#allocation4 + $0x8] sm:$0xff]
          %v495 = vmul.f32 %v396, %v396
          %v496 = vmul.f32 %v397, %v397
          %497 = vadd.xlane.f32.xlu0 %v495
          %v498 = vpop.xlane.xlu0 %497
          %499 = vadd.xlane.f32.xlu0 %v496
          %v500 = vpop.xlane.xlu0 %499
          %v501 = vadd.f32 %v493, %v498
          %v502 = vadd.f32 %v494, %v500
          %503 = vst.msk [vmem:[#allocation4] sm:$0xff] %vm490, %v501
          %504 = vst.msk [vmem:[#allocation4 + $0x8] sm:$0xff] %vm490, %v502
          %v505 = vld [vmem:[#allocation5] sm:$0xff]
          %v506 = vld [vmem:[#allocation5 + $0x8] sm:$0xff]
          %507 = vadd.xlane.f32.xlu0 %v394
          %v508 = vpop.xlane.xlu0 %507
          %509 = vadd.xlane.f32.xlu0 %v395
          %v510 = vpop.xlane.xlu0 %509
          %v511 = vadd.f32 %v505, %v508
          %v512 = vadd.f32 %v506, %v510
          %513 = vst.msk [vmem:[#allocation5] sm:$0xff] %vm490, %v511
          %514 = vst.msk [vmem:[#allocation5 + $0x8] sm:$0xff] %vm490, %v512
        $region56: #{tpu_custom_call.1} parent=35 // pred_fallthru
          _
        %p515 = scmp.eq.s32.totalorder %s24, 3
        // Predicated region
        $region57: #{tpu_custom_call.1} parent=35 // pred_check
          %p516 = pneg %p515
        $region58: #{tpu_custom_call.1} parent=35 // pred_check_branch
          %518 = sbr.rel (%p516) target = $region60
        $region59: #{tpu_custom_call.1} parent=35 // pred_region
          %v519 = vld [vmem:[#allocation3] sm:$0xff]
          %v520 = vld [vmem:[#allocation3 + $0x8] sm:$0xff]
          %v521 = vrsqrt.pop %v519
          %v522 = vmul.f32 %v519, %v521
          %vm523 = vcmp.eq.f32.partialorder %v519, inf
          %v524 = vsel %vm523, %v519, %v522
          %vm525 = vcmp.eq.f32.partialorder %v519, 0.0
          %v526 = vand.u32 %v519, 2147483648
          %v527 = vsel %vm525, %v526, %v524
          %v528 = vrsqrt.pop %v520
          %v529 = vmul.f32 %v520, %v528
          %vm530 = vcmp.eq.f32.partialorder %v520, inf
          %v531 = vsel %vm530, %v520, %v529
          %vm532 = vcmp.eq.f32.partialorder %v520, 0.0
          %v533 = vand.u32 %v520, 2147483648
          %v534 = vsel %vm532, %v533, %v531
          %v535 = vmax.f32 %v527, 1e-12
          %v536 = vmax.f32 %v534, 1e-12
          %v537 = vrcp.pop %v535
          %v538 = vmul.f32 1.0, %v537
          %v539 = vrcp.pop %v536
          %v540 = vmul.f32 1.0, %v539
          %v541 = vld [vmem:[#allocation4] sm:$0xff]
          %v542 = vld [vmem:[#allocation4 + $0x8] sm:$0xff]
          %v543 = vrsqrt.pop %v541
          %v544 = vmul.f32 %v541, %v543
          %vm545 = vcmp.eq.f32.partialorder %v541, inf
          %v546 = vsel %vm545, %v541, %v544
          %vm547 = vcmp.eq.f32.partialorder %v541, 0.0
          %v548 = vand.u32 %v541, 2147483648
          %v549 = vsel %vm547, %v548, %v546
          %v550 = vrsqrt.pop %v542
          %v551 = vmul.f32 %v542, %v550
          %vm552 = vcmp.eq.f32.partialorder %v542, inf
          %v553 = vsel %vm552, %v542, %v551
          %vm554 = vcmp.eq.f32.partialorder %v542, 0.0
          %v555 = vand.u32 %v542, 2147483648
          %v556 = vsel %vm554, %v555, %v553
          %v557 = vmax.f32 %v549, 1e-12
          %v558 = vmax.f32 %v556, 1e-12
          %v559 = vrcp.pop %v557
          %v560 = vmul.f32 1.0, %v559
          %v561 = vrcp.pop %v558
          %v562 = vmul.f32 1.0, %v561
          %v563 = vlaneseq
          %v564 = vshrl.u32 %v563, 7
          %v565 = vadd.s32 %v564, 8
          %v566 = vlaneseq
          %v567 = vand.u32 %v566, 127
          %vm568 = vcmp.eq.s32.totalorder %v564, %v567
          %vm569 = vcmp.eq.s32.totalorder %v565, %v567
          %v570 = vsel %vm568, 1, 0
          %v571 = vsel %vm569, 1, 0
          %v572 = vcvt.s32.f32 %v570
          %v573 = vcvt.s32.f32 %v571
          %575 = vset.pattern.permute.xlu0 0
          %576 = vperm.xlu0 %575, %v560
          %v577 = vpop.permute.xlu0 %576
          %580 = vset.pattern.permute.xlu0 0
          %581 = vperm.xlu0 %580, %v562
          %v582 = vpop.permute.xlu0 %581
          %v584 = vmul.f32 %v572, %v577
          %v585 = vmul.f32 %v573, %v582
          %v586 = vld [vmem:[#allocation2] sm:$0xff]
          %v587 = vld [vmem:[#allocation2 + $0x8] sm:$0xff]
          %589 = vset.pattern.permute.xlu0 0
          %590 = vperm.xlu0 %589, %v538
          %v591 = vpop.permute.xlu0 %590
          %594 = vset.pattern.permute.xlu0 0
          %595 = vperm.xlu0 %594, %v540
          %v596 = vpop.permute.xlu0 %595
          %v598 = vmul.f32 %v586, %v591
          %v599 = vmul.f32 %v587, %v596
          %vm600 = vcmask 130048
          %v602 = vsel %vm600, %v598, 0
          %v605 = vsel %vm600, %v599, 0
          %607 = vmatprep.subr.mxu0 0.0
          %608 = vmatpush1.msra.mxu0 0.0
          %609 = vmatprep.subr.mxu0 0.0
          %610 = vmatpush1.msra.mxu0 0.0
          %611 = vmatprep.subr.mxu0 0.0
          %612 = vmatpush1.msra.mxu0 0.0
          %613 = vmatprep.subr.mxu0 0.0
          %614 = vmatpush1.msra.mxu0 0.0
          %615 = vmatprep.subr.mxu0 0.0
          %616 = vmatpush1.msra.mxu0 0.0
          %617 = vmatprep.subr.mxu0 0.0
          %618 = vmatpush1.msra.mxu0 0.0
          %619 = vmatprep.subr.mxu0 0.0
          %620 = vmatpush1.msra.mxu0 0.0
          %621 = vmatprep.subr.mxu0 0.0
          %622 = vmatpush1.msra.mxu0 0.0
          %623 = vmatprep.subr.mxu0 0.0
          %624 = vmatpush1.msra.mxu0 0.0
          %625 = vmatprep.subr.mxu0 0.0
          %626 = vmatpush1.msra.mxu0 0.0
          %627 = vmatprep.subr.mxu0 0.0
          %628 = vmatpush1.msra.mxu0 0.0
          %629 = vmatprep.subr.mxu0 0.0
          %630 = vmatpush1.msra.mxu0 0.0
          %631 = vmatprep.subr.mxu0 0.0
          %632 = vmatpush1.msra.mxu0 0.0
          %633 = vmatprep.subr.mxu0 0.0
          %634 = vmatpush1.msra.mxu0 0.0
          %635 = vmatprep.subr.mxu0 0.0
          %636 = vmatpush1.msra.mxu0 %v585
          %637 = vmatprep.subr.mxu0 0.0
          %638 = vmatpush1.msra.mxu0 %v584
          %639 = vmatprep.subr.mxu0 0.0
          %640 = vmatpush2.msra.mxu0 0.0
          %641 = vmatprep.subr.mxu0 0.0
          %642 = vmatpush2.msra.mxu0 0.0
          %643 = vmatprep.subr.mxu0 0.0
          %644 = vmatpush2.msra.mxu0 0.0
          %645 = vmatprep.subr.mxu0 0.0
          %646 = vmatpush2.msra.mxu0 0.0
          %647 = vmatprep.subr.mxu0 0.0
          %648 = vmatpush2.msra.mxu0 0.0
          %649 = vmatprep.subr.mxu0 0.0
          %650 = vmatpush2.msra.mxu0 0.0
          %651 = vmatprep.subr.mxu0 0.0
          %652 = vmatpush2.msra.mxu0 0.0
          %653 = vmatprep.subr.mxu0 0.0
          %654 = vmatpush2.msra.mxu0 0.0
          %655 = vmatprep.subr.mxu0 0.0
          %656 = vmatpush2.msra.mxu0 0.0
          %657 = vmatprep.subr.mxu0 0.0
          %658 = vmatpush2.msra.mxu0 0.0
          %659 = vmatprep.subr.mxu0 0.0
          %660 = vmatpush2.msra.mxu0 0.0
          %661 = vmatprep.subr.mxu0 0.0
          %662 = vmatpush2.msra.mxu0 0.0
          %663 = vmatprep.subr.mxu0 0.0
          %664 = vmatpush2.msra.mxu0 0.0
          %665 = vmatprep.subr.mxu0 0.0
          %666 = vmatpush2.msra.mxu0 0.0
          %667 = vmatprep.subr.mxu0 0.0
          %668 = vmatpush2.msra.mxu0 0.0
          %669 = vmatprep.subr.mxu0 0.0
          %670 = vmatpush2.msra.mxu0 0.0
          %671 = vmatprep.mubr.f32.mxu0 0.0
          %672 = vmatmul.mubr.f32.gmra.mxu0 %v602
          %v673 = vpop.f32.mrf.mxu0
          %v674 = vadd.f32 0.0, %v673
          %v675 = vpop.f32.mrf.mxu0
          %676 = vmatprep.mubr.f32.mxu0 0.0
          %677 = vmatmul.mubr.f32.gmra.mxu0 %v605
          %v678 = vpop.f32.mrf.mxu0
          %v679 = vadd.f32 0.0, %v678
          %v680 = vpop.f32.mrf.mxu0
          %681 = vdwg.mxu0
          %v682 = vsel %vm600, %v674, -inf
          %683 = vmax.xlane.f32.xlu0 %v682
          %v684 = vpop.xlane.xlu0 %683
          %v685 = vsel %vm600, %v679, -inf
          %686 = vmax.xlane.f32.xlu0 %v685
          %v687 = vpop.xlane.xlu0 %686
          %v688 = vsub.f32 %v674, %v684
          %v689 = vsub.f32 %v679, %v687
          %v690 = vmul.f32 %v688, 1.442695
          %v691 = vpow.pop %v690
          %v692 = vmul.f32 %v689, 1.442695
          %v693 = vpow.pop %v692
          %v694 = vsel %vm600, %v691, 0.0
          %695 = vadd.xlane.f32.xlu0 %v694
          %v696 = vpop.xlane.xlu0 %695
          %v697 = vsel %vm600, %v693, 0.0
          %698 = vadd.xlane.f32.xlu0 %v697
          %v699 = vpop.xlane.xlu0 %698
          %v700 = vlog2.pop %v696
          %v701 = vmul.f32 %v700, 0.6931472
          %v702 = vlog2.pop %v699
          %v703 = vmul.f32 %v702, 0.6931472
          %v704 = vadd.f32 %v684, %v701
          %v705 = vadd.f32 %v687, %v703
          %v706 = vmul.f32 %v674, %v572
          %v707 = vmul.f32 %v679, %v573
          %v708 = vsel %vm600, %v706, 0.0
          %709 = vadd.xlane.f32.xlu0 %v708
          %v710 = vpop.xlane.xlu0 %709
          %v711 = vsel %vm600, %v707, 0.0
          %712 = vadd.xlane.f32.xlu0 %v711
          %v713 = vpop.xlane.xlu0 %712
          %v714 = vsub.f32 %v704, %v710
          %v715 = vsub.f32 %v705, %v713
          %vm716 = vcmask 7168
          %v717 = vsel %vm716, %v714, 0.0
          %v718 = vsel %vm716, %v715, 0.0
          %v719 = vadd.f32 %v717, %v718
          %720 = vadd.xlane.f32.xlu0 %v719
          %v721 = vpop.xlane.xlu0 %720
          %v722 = vrot.slane %v721, 4
          %v723 = vadd.f32 %v721, %v722
          %v724 = vrot.slane %v723, 2
          %v725 = vadd.f32 %v723, %v724
          %v726 = vrot.slane %v725, 1
          %v727 = vadd.f32 %v725, %v726
          %s728 = vtos %v727
          %s729 = smul.f32 %s728, 0.0625
          %v730 = vld [vmem:[#allocation5] sm:$0xff]
          %v731 = vld [vmem:[#allocation5 + $0x8] sm:$0xff]
          %v732 = vsel %vm716, %v730, 0.0
          %v733 = vsel %vm716, %v731, 0.0
          %v734 = vadd.f32 %v732, %v733
          %735 = vadd.xlane.f32.xlu0 %v734
          %v736 = vpop.xlane.xlu0 %735
          %v737 = vrot.slane %v736, 4
          %v738 = vadd.f32 %v736, %v737
          %v739 = vrot.slane %v738, 2
          %v740 = vadd.f32 %v738, %v739
          %v741 = vrot.slane %v740, 1
          %v742 = vadd.f32 %v740, %v741
          %s743 = vtos %v742
          %v744 = vstv %s743
          %v745 = vrcp.pop %v744
          %v746 = vmul.f32 %v730, %v745
          %v747 = vmul.f32 %v731, %v745
          %v748 = vmax.f32 %v746, 1e-12
          %v749 = vmax.f32 %v747, 1e-12
          %v750 = vlog2.pop %v748
          %v751 = vmul.f32 %v750, 0.6931472
          %v752 = vlog2.pop %v749
          %v753 = vmul.f32 %v752, 0.6931472
          %v754 = vmul.f32 %v746, %v751
          %v755 = vmul.f32 %v747, %v753
          %v756 = vsel %vm716, %v754, 0.0
          %v757 = vsel %vm716, %v755, 0.0
          %v758 = vadd.f32 %v756, %v757
          %759 = vadd.xlane.f32.xlu0 %v758
          %v760 = vpop.xlane.xlu0 %759
          %v761 = vrot.slane %v760, 4
          %v762 = vadd.f32 %v760, %v761
          %v763 = vrot.slane %v762, 2
          %v764 = vadd.f32 %v762, %v763
          %v765 = vrot.slane %v764, 1
          %v766 = vadd.f32 %v764, %v765
          %s767 = vtos %v766
          %s768 = sadd.f32 %s767, 2.7725887
          %s769 = sld [smem:[#allocation6]]
          %s770 = smul.f32 %s769, %s768
          %s771 = sadd.f32 %s729, %s770
          %s772 = scalar_lea.smem [#allocation13], 0
          %773 = sst [smem:[%s772]] %s771
        $region60: #{tpu_custom_call.1} parent=35 // pred_fallthru
          _
        // Predicated region
        $region61: #{tpu_custom_call.1} parent=35 // pred_check
          %p774 = pneg %p131
        $region62: #{tpu_custom_call.1} parent=35 // pred_check_branch
          %776 = sbr.rel (%p774) target = $region64
        $region63: #{tpu_custom_call.1} parent=35 // pred_region
          %s778 = ssub.s32 16, 16
          %779 = vsyncadd [#allocation10], %s778
          %782 = dma.smem_to_hbm [#allocation13], 16, %s4, [#allocation10]
        $region64: #{tpu_custom_call.1} parent=35 // pred_fallthru
          _
        // Predicated region
        $region65: #{tpu_custom_call.1} parent=35 // pred_check
          %p783 = pneg %p131
        $region66: #{tpu_custom_call.1} parent=35 // pred_check_branch
          %785 = sbr.rel (%p783) target = $region68
        $region67: #{tpu_custom_call.1} parent=35 // pred_region
          %786 = dma.done [#allocation10], 16
        $region68: #{tpu_custom_call.1} parent=35 // pred_fallthru
          _
        %787 = sfence
      $region36: #{tpu_custom_call.1} parent=5 // pred_fallthru
        _
      %p788 = scmp.le.s32.totalorder 2, %s19
      // Predicated region
      $region69: #{tpu_custom_call.1} parent=5 // pred_check
        %p789 = pneg %p788
      $region70: #{tpu_custom_call.1} parent=5 // pred_check_branch
        %791 = sbr.rel (%p789) target = $region72
      $region71: #{tpu_custom_call.1} parent=5 // pred_region
        %s792 = ssub.s32 %s19, 2
      $region72: #{tpu_custom_call.1} parent=5 // pred_fallthru
        _
    $region6: #{tpu_custom_call.1} parent=1 // loop_footer
      %s23 = sadd.s32 1, %s19
    $region7: #{tpu_custom_call.1} parent=1 // loop_footer_branch
      %18 = sbr.rel target = $region3
    $region8: #{tpu_custom_call.1} parent=1 // loop_exit
      _
    %793 = vsyncpa [#allocation9], 1
    %s794 = scalar_lea.sflag [#allocation9], 1
    %795 = vsyncpa %s794, 1
    %796 = vsyncpa [#allocation12], 1
    %s797 = scalar_lea.sflag [#allocation12], 1
    %798 = vsyncpa %s797, 1
    %799 = vsyncpa [#allocation10], 1
    %s800 = scalar_lea.sflag [#allocation10], 1
    %801 = vsyncpa %s800, 1

</llo_original>
